<compile_context>
chip_gen: v5e
topology: v5e:2x2
jax: 0.10.0
libtpu: 0.0.40
codegen_flags: <defaults>
</compile_context>

<pallas_src>
import functools
import math

import jax
import jax.numpy as jnp
from jax.experimental import pallas as pl
from jax.experimental.pallas import tpu as pltpu


# ----------------------------------------------------------------------------
# Kernels
# ----------------------------------------------------------------------------

def _layernorm_kernel(x_ref, gamma_ref, beta_ref, o_ref, *, eps: float):
    """Plain path: rows on sublanes, full d_model on the lane axis."""
    x = x_ref[...].astype(jnp.float32)               # (row_tile, d_model)
    d = x.shape[-1]
    mean = jnp.mean(x, axis=-1, keepdims=True)       # XLU cross-lane reduce (free filler)
    diff = x - mean
    # Unbiased variance (torch.Tensor.var default, correction = 1).
    var = jnp.sum(diff * diff, axis=-1, keepdims=True) / jnp.float32(d - 1)
    inv_std = jax.lax.rsqrt(var + jnp.float32(eps))
    o_ref[...] = (gamma_ref[...] * (diff * inv_std) + beta_ref[...]).astype(o_ref.dtype)


def _layernorm_folded_kernel(x_ref, gamma_ref, beta_ref, avg_ref, o_ref, *,
                             eps: float, d_model: int):
    """Lane-folded path for small d_model (128 % d_model == 0, d_model < 128).

    `fold = 128 // d_model` original rows are packed into the 128-lane axis so
    loads/stores are lane-dense.  Segment (per original row) mean and
    sum-of-squares are computed with a block-diagonal averaging matmul on the
    otherwise-idle MXU at HIGHEST precision (f32-accurate).
    """
    x = x_ref[...].astype(jnp.float32)                # (row_tile, 128)
    avg = avg_ref[...]                                # (128, 128) block-diag ones/d
    mean = jnp.dot(x, avg, preferred_element_type=jnp.float32,
                   precision=jax.lax.Precision.HIGHEST)
    diff = x - mean
    ssq = jnp.dot(diff * diff, avg, preferred_element_type=jnp.float32,
                  precision=jax.lax.Precision.HIGHEST) * jnp.float32(d_model)
    var = ssq / jnp.float32(d_model - 1)
    inv_std = jax.lax.rsqrt(var + jnp.float32(eps))
    o_ref[...] = (gamma_ref[...] * (diff * inv_std) + beta_ref[...]).astype(o_ref.dtype)


# ----------------------------------------------------------------------------
# Tile sizing
# ----------------------------------------------------------------------------

def _round_up(n: int, m: int) -> int:
    return ((n + m - 1) // m) * m


def _vmem_budget_bytes() -> int:
    """Scoped-VMEM limit to request: ~75% of physical VMEM.

    v5e/v6e (128 MiB) -> 96 MiB; v7x (64 MiB per TC) -> 48 MiB.  If TPU info
    is unavailable, fall back to 32 MiB so the request is safe on v7x.
    """
    try:
        cap = int(getattr(pltpu.get_tpu_info(), "vmem_capacity_bytes"))
    except Exception:
        return 32 * 1024 * 1024
    return max(32 * 1024 * 1024, (cap * 3) // 4)


def _pick_row_tile(rows: int, d_model: int, itemsize: int, vmem_limit: int) -> int:
    """Row tile sized to a per-tile byte target within the VMEM budget."""
    # Sublane packing per dtype: 8 rows (4B), 16 (2B), 32 (1B).
    sub = max(8, 32 // max(int(itemsize), 1))
    # VMEM per tile row: in + out double-buffered at the array dtype, plus
    # ~3 f32 full-tile temporaries (upcast, diff, normalized) in VMEM.
    per_row = d_model * (4 * itemsize + 3 * 4)
    vmem_rows = (int(vmem_limit) * 4 // 5) // max(per_row, 1)
    # ~4 MiB of input per tile amortizes the ~0.35 us fixed step overhead even
    # at v7x's 3.2 TB/s HBM; growing further only raises VMEM pressure (v5e
    # especially) with no roofline gain.
    target_rows = (4 * 1024 * 1024) // max(d_model * itemsize, 1)
    row_tile = min(vmem_rows, max(target_rows, sub))
    row_tile = max(sub, (row_tile // sub) * sub)
    # No point tiling past the actual number of rows.
    row_tile = min(row_tile, _round_up(rows, sub))
    # Prefer >= 4 grid steps (>= 2 per TensorCore when the "parallel" row axis
    # is sharded over v7x's two cores); stop at the sublane floor.
    while row_tile > sub and pl.cdiv(rows, row_tile) < 4:
        row_tile = max(sub, ((row_tile // 2) // sub) * sub)
    return row_tile


# ----------------------------------------------------------------------------
# Wrapper
# ----------------------------------------------------------------------------

def layer_normalization(x: jax.Array,
                        gamma: jax.Array,
                        beta: jax.Array,
                        eps: float = 1e-6,
                        row_tile: int | None = None) -> jax.Array:
    """LayerNorm over the last axis of x, matching the PyTorch module."""
    orig_shape = x.shape
    d_model = orig_shape[-1]
    assert gamma.shape == (d_model,)
    assert beta.shape == (d_model,)

    rows = math.prod(orig_shape[:-1]) if len(orig_shape) > 1 else 1
    if rows == 0 or d_model == 0:
        return x  # zero-sized input: nothing to normalize

    vmem_limit = _vmem_budget_bytes()
    itemsize = jnp.dtype(x.dtype).itemsize

    gamma_f32 = gamma.astype(jnp.float32)
    beta_f32 = beta.astype(jnp.float32)

    fold = 128 // d_model if (2 <= d_model < 128 and 128 % d_model == 0) else 1
    use_fold = fold > 1 and rows % fold == 0

    if use_fold:
        rows_k = rows // fold
        d_k = fold * d_model                      # == 128 (lane-dense)
        x2d = x.reshape(rows_k, d_k)
        gamma2d = jnp.tile(gamma_f32, (fold,)).reshape(1, d_k)
        beta2d = jnp.tile(beta_f32, (fold,)).reshape(1, d_k)
        # Block-diagonal averaging matrix: A[m, l] = 1/d if same segment.
        avg = jnp.kron(jnp.eye(fold, dtype=jnp.float32),
                       jnp.full((d_model, d_model), 1.0 / d_model, jnp.float32))
        kernel = functools.partial(_layernorm_folded_kernel, eps=eps, d_model=d_model)
        extra_inputs = (avg,)
        extra_specs = [pl.BlockSpec((d_k, d_k), lambda i: (0, 0))]
    else:
        rows_k, d_k = rows, d_model
        x2d = x.reshape(rows_k, d_k)
        gamma2d = gamma_f32.reshape(1, d_k)
        beta2d = beta_f32.reshape(1, d_k)
        kernel = functools.partial(_layernorm_kernel, eps=eps)
        extra_inputs = ()
        extra_specs = []

    rt = row_tile if row_tile is not None else _pick_row_tile(
        rows_k, d_k, itemsize, vmem_limit)

    # Ragged last block: rows are independent, OOB reads only feed masked
    # writes -> no pad / slice round-trip needed.
    grid = (pl.cdiv(rows_k, rt),)

    cost = pl.CostEstimate(
        flops=8 * rows * d_model,
        transcendentals=rows,  # one rsqrt per row
        bytes_accessed=2 * rows * d_model * itemsize + 2 * d_model * 4,
    )

    # TODO(synk): if a v7x profile shows only one TensorCore active on the
    # "parallel" row axis, switch it to pltpu.CORE_PARALLEL.
    out = pl.pallas_call(
        kernel,
        out_shape=jax.ShapeDtypeStruct((rows_k, d_k), x.dtype),
        grid_spec=pltpu.PrefetchScalarGridSpec(
            num_scalar_prefetch=0,
            grid=grid,
            in_specs=[
                pl.BlockSpec((rt, d_k), lambda i: (i, 0)),
                pl.BlockSpec((1, d_k), lambda i: (0, 0)),
                pl.BlockSpec((1, d_k), lambda i: (0, 0)),
                *extra_specs,
            ],
            out_specs=pl.BlockSpec((rt, d_k), lambda i: (i, 0)),
        ),
        compiler_params=pltpu.CompilerParams(
            dimension_semantics=("parallel",),
            vmem_limit_bytes=vmem_limit,
        ),
        cost_estimate=cost,
    )(x2d, gamma2d, beta2d, *extra_inputs)

    return out.reshape(orig_shape)


# ----------------------------------------------------------------------------
# Reference + self-test
# ----------------------------------------------------------------------------

def _reference(x, gamma, beta, eps=1e-6):
    xf = x.astype(jnp.float32)
    gf = gamma.astype(jnp.float32)
    bf = beta.astype(jnp.float32)
    mean = xf.mean(axis=-1, keepdims=True)
    var = ((xf - mean) ** 2).sum(axis=-1, keepdims=True) / (xf.shape[-1] - 1)
    return (gf * ((xf - mean) / jnp.sqrt(var + eps)) + bf).astype(x.dtype)


if __name__ == "__main__":
    key = jax.random.PRNGKey(0)
    k1, k2, k3, kg, kb = jax.random.split(key, 5)

    # 1) Small d_model (< 128) -> lane-folded path. (batch=2, seq=8, d_model=32)
    x1 = jax.random.normal(k1, (2, 8, 32), dtype=jnp.float32)
    g1 = 1.0 + 0.1 * jax.random.normal(kg, (32,), dtype=jnp.float32)
    b1 = 0.1 * jax.random.normal(kb, (32,), dtype=jnp.float32)
    y1 = jax.block_until_ready(layer_normalization(x1, g1, b1, eps=1e-6))
    r1 = _reference(x1, g1, b1, eps=1e-6)
    assert y1.shape == x1.shape
    assert jnp.allclose(y1, r1, atol=3e-5, rtol=1e-4), "mismatch vs reference (folded path)"

    # 2) d_model multiple of 128 with ragged rows -> plain path, masked tail.
    x2 = jax.random.normal(k2, (3, 5, 128), dtype=jnp.float32)
    g2 = jnp.ones((128,), dtype=jnp.float32)
    b2 = jnp.zeros((128,), dtype=jnp.float32)
    y2 = jax.block_until_ready(layer_normalization(x2, g2, b2, eps=1e-6))
    r2 = _reference(x2, g2, b2, eps=1e-6)
    assert y2.shape == x2.shape
    assert jnp.allclose(y2, r2, atol=1e-5, rtol=1e-5), "mismatch vs reference (plain path)"

    # 3) bf16 inputs (packed sublanes -> 16-row tiling, f32 internal math).
    x3 = jax.random.normal(k3, (2, 64, 256), dtype=jnp.float32).astype(jnp.bfloat16)
    g3 = jnp.ones((256,), dtype=jnp.bfloat16)
    b3 = jnp.zeros((256,), dtype=jnp.bfloat16)
    y3 = jax.block_until_ready(layer_normalization(x3, g3, b3, eps=1e-6))
    r3 = _reference(x3, g3, b3, eps=1e-6)
    assert y3.shape == x3.shape and y3.dtype == jnp.bfloat16
    assert jnp.allclose(y3.astype(jnp.float32), r3.astype(jnp.float32),
                        atol=2e-2, rtol=2e-2), "mismatch vs reference (bf16)"

    print("KERNEL_OK")
</pallas_src>

<mosaic_0001>
module attributes {stable_mosaic.version = 11 : i64} {
  func.func @_layernorm_folded_kernel(%arg0: i32, %arg1: memref<8x128xf32, #tpu.memory_space<vmem>>, %arg2: memref<1x128xf32, #tpu.memory_space<vmem>>, %arg3: memref<1x128xf32, #tpu.memory_space<vmem>>, %arg4: memref<128x128xf32, #tpu.memory_space<vmem>>, %arg5: memref<8x128xf32, #tpu.memory_space<vmem>>) attributes {dimension_semantics = [#tpu.dimension_semantics<parallel>], iteration_bounds = array<i64: 1>, scalar_prefetch = 0 : i64, scratch_operands = 0 : i64, tpu.core_type = #tpu.core_type<tc>, window_params = [{transform_indices = @transform_0, window_bounds = array<i64: 8, 128>}, {pipeline_mode = #tpu.pipeline_mode<synchronous>, transform_indices = @transform_1, window_bounds = array<i64: 1, 128>}, {pipeline_mode = #tpu.pipeline_mode<synchronous>, transform_indices = @transform_2, window_bounds = array<i64: 1, 128>}, {pipeline_mode = #tpu.pipeline_mode<synchronous>, transform_indices = @transform_3, window_bounds = array<i64: 128, 128>}, {transform_indices = @transform_4, window_bounds = array<i64: 8, 128>}]} {
    %c0 = arith.constant 0 : index
    %c0_0 = arith.constant 0 : index
    %0 = vector.load %arg1[%c0, %c0_0] : memref<8x128xf32, #tpu.memory_space<vmem>>, vector<8x128xf32>
    %c0_1 = arith.constant 0 : index
    %c0_2 = arith.constant 0 : index
    %1 = vector.load %arg4[%c0_1, %c0_2] : memref<128x128xf32, #tpu.memory_space<vmem>>, vector<128x128xf32>
    %cst = arith.constant dense<0.000000e+00> : vector<8x128xf32>
    %2 = tpu.matmul %0, %1, %cst {dimension_numbers = #tpu.dot_dimension_numbers<[1], [0], [0], [1], [0, 0, 1, 1], [], []>, precision = #tpu.contract_precision<fp32>} : vector<8x128xf32>, vector<128x128xf32>, vector<8x128xf32> -> vector<8x128xf32>
    %3 = arith.subf %0, %2 : vector<8x128xf32>
    %4 = arith.mulf %3, %3 : vector<8x128xf32>
    %cst_3 = arith.constant dense<0.000000e+00> : vector<8x128xf32>
    %5 = tpu.matmul %4, %1, %cst_3 {dimension_numbers = #tpu.dot_dimension_numbers<[1], [0], [0], [1], [0, 0, 1, 1], [], []>, precision = #tpu.contract_precision<fp32>} : vector<8x128xf32>, vector<128x128xf32>, vector<8x128xf32> -> vector<8x128xf32>
    %cst_4 = arith.constant 3.200000e+01 : f32
    %6 = vector.broadcast %cst_4 : f32 to vector<8x128xf32>
    %7 = arith.mulf %5, %6 : vector<8x128xf32>
    %cst_5 = arith.constant 3.100000e+01 : f32
    %8 = vector.broadcast %cst_5 : f32 to vector<8x128xf32>
    %9 = arith.divf %7, %8 : vector<8x128xf32>
    %cst_6 = arith.constant 9.99999997E-7 : f32
    %10 = vector.broadcast %cst_6 : f32 to vector<8x128xf32>
    %11 = arith.addf %9, %10 : vector<8x128xf32>
    %12 = math.rsqrt %11 : vector<8x128xf32>
    %c0_7 = arith.constant 0 : index
    %c0_8 = arith.constant 0 : index
    %13 = vector.load %arg2[%c0_7, %c0_8] : memref<1x128xf32, #tpu.memory_space<vmem>>, vector<1x128xf32>
    %14 = arith.mulf %3, %12 : vector<8x128xf32>
    %15 = vector.broadcast %13 : vector<1x128xf32> to vector<8x128xf32>
    %16 = arith.mulf %15, %14 : vector<8x128xf32>
    %c0_9 = arith.constant 0 : index
    %c0_10 = arith.constant 0 : index
    %17 = vector.load %arg3[%c0_9, %c0_10] : memref<1x128xf32, #tpu.memory_space<vmem>>, vector<1x128xf32>
    %18 = vector.broadcast %17 : vector<1x128xf32> to vector<8x128xf32>
    %19 = arith.addf %16, %18 : vector<8x128xf32>
    %c0_11 = arith.constant 0 : index
    %c0_12 = arith.constant 0 : index
    %20 = vector.load %arg5[%c0_11, %c0_12] : memref<8x128xf32, #tpu.memory_space<vmem>>, vector<8x128xf32>
    tpu.vector_store %arg5[%c0_11, %c0_12], %19 {strides = array<i32>} : memref<8x128xf32, #tpu.memory_space<vmem>>, vector<8x128xf32>,
    return
  }
  func.func @transform_0(%arg0: i32) -> (i32, i32) {
    %c0_i32 = arith.constant 0 : i32
    %c0_i32_0 = arith.constant 0 : i32
    return %arg0, %c0_i32 : i32, i32
  }
  func.func @transform_1(%arg0: i32) -> (i32, i32) {
    %c0_i32 = arith.constant 0 : i32
    %c0_i32_0 = arith.constant 0 : i32
    %c0_i32_1 = arith.constant 0 : i32
    return %c0_i32, %c0_i32_0 : i32, i32
  }
  func.func @transform_2(%arg0: i32) -> (i32, i32) {
    %c0_i32 = arith.constant 0 : i32
    %c0_i32_0 = arith.constant 0 : i32
    %c0_i32_1 = arith.constant 0 : i32
    return %c0_i32, %c0_i32_0 : i32, i32
  }
  func.func @transform_3(%arg0: i32) -> (i32, i32) {
    %c0_i32 = arith.constant 0 : i32
    %c0_i32_0 = arith.constant 0 : i32
    %c0_i32_1 = arith.constant 0 : i32
    return %c0_i32, %c0_i32_0 : i32, i32
  }
  func.func @transform_4(%arg0: i32) -> (i32, i32) {
    %c0_i32 = arith.constant 0 : i32
    %c0_i32_0 = arith.constant 0 : i32
    return %arg0, %c0_i32 : i32, i32
  }
}

</mosaic_0001>

<llo_original>
// kernel: tpu_custom_call.1
$region0: #{tpu_custom_call.1}
  #allocation0 [shape = 'u32[]', space=smem, size = 0x4, offset = 0x4, fixed_abs, tag = 'smem constant byte address 0x4 - core index']
  #allocation1 [shape = 'u32[72,128]{1,0:T(1,128)}', space=vmem, size = 0x9000, scoped, tag = 'internal scratch']
  %s0 = inlined_call_operand.hbm [shape: f32[4,128], index: 0, kind: input, shape index: {}]
  %s1 = inlined_call_operand.hbm [shape: f32[1,128], index: 1, kind: input, shape index: {}]
  %s2 = inlined_call_operand.vmem [shape: f32[1,128], index: 2, kind: input, shape index: {}]
  %s3 = inlined_call_operand.hbm [shape: f32[128,128], index: 3, kind: input, shape index: {}]
  %s4 = inlined_call_operand.hbm [shape: f32[4,128], index: 4, kind: output, shape index: {}]
  %s5 = sld [smem:[#allocation0]]
  $region38: #{tpu_custom_call.1} parent=0
    _
  %s7 = ssub.s32 1, %s5
  %s8 = scalar_select 0, %s7, %s5
  $region1: #{tpu_custom_call.1} parent=0
    #allocation2 [shape = 'u8[4096]{0}', space=vmem, size = 0x1000, scoped, tag = 'input window, operand 0, single buffered']
    #allocation3 [shape = 's32[1]{0}', space=sflag, size = 0x4, scoped, tag = 'scoped memory for tpu_custom_call.1']
    #allocation4 [shape = 's32[1]{0}', space=sflag, size = 0x4, scoped, tag = 'scoped memory for tpu_custom_call.1']
    #allocation5 [shape = 'u8[512]{0}', space=vmem, size = 0x400, scoped, tag = 'input window, operand 1, single buffered']
    #allocation6 [shape = 's32[1]{0}', space=sflag, size = 0x4, scoped, tag = 'scoped memory for tpu_custom_call.1']
    #allocation7 [shape = 'u8[65536]{0}', space=vmem, size = 0x10000, scoped, tag = 'input window, operand 3, single buffered']
    #allocation8 [shape = 'u8[4096]{0}', space=vmem, size = 0x1000, scoped, tag = 'output window, operand 0, single buffered']
    %9 = vsyncpa [#allocation3], 0
    %10 = vsyncpa [#allocation6], 0
    %11 = vsyncpa [#allocation4], 0
    // Predicated region
    $region2: #{tpu_custom_call.1} parent=1 // pred_check
      _
    $region3: #{tpu_custom_call.1} parent=1 // pred_check_branch
      %13 = sbr.rel (0) target = $region5
    $region4: #{tpu_custom_call.1} parent=1 // pred_region
      %15 = vsyncadd [#allocation3], 64
      %s16 = sshll.u32 %s0, 4
      %s17 = int_to_ptr.hbm [resolvable:$true] %s16
      %s18 = sshll.u32 [#allocation2], 4
      %s19 = int_to_ptr.vmem [resolvable:$true] %s18
      %24 = dma.hbm_to_vmem [thread:$0]  %s17, 64, %s19, [#allocation3], 64, 64, 4
    $region5: #{tpu_custom_call.1} parent=1 // pred_fallthru
      _
    // Predicated region
    $region6: #{tpu_custom_call.1} parent=1 // pred_check
      _
    $region7: #{tpu_custom_call.1} parent=1 // pred_check_branch
      %26 = sbr.rel (0) target = $region9
    $region8: #{tpu_custom_call.1} parent=1 // pred_region
      %28 = vsyncadd [#allocation6], 0
      %s30 = sshll.u32 %s1, 4
      %s31 = int_to_ptr.hbm [resolvable:$true] %s30
      %s32 = sshll.u32 [#allocation5], 4
      %s33 = int_to_ptr.vmem [resolvable:$true] %s32
      %35 = dma.hbm_to_vmem [thread:$0]  %s31, 16, %s33, [#allocation6]
    $region9: #{tpu_custom_call.1} parent=1 // pred_fallthru
      _
    // Predicated region
    $region10: #{tpu_custom_call.1} parent=1 // pred_check
      _
    $region11: #{tpu_custom_call.1} parent=1 // pred_check_branch
      %37 = sbr.rel (0) target = $region13
    $region12: #{tpu_custom_call.1} parent=1 // pred_region
      _
    $region13: #{tpu_custom_call.1} parent=1 // pred_fallthru
      _
    // Predicated region
    $region14: #{tpu_custom_call.1} parent=1 // pred_check
      _
    $region15: #{tpu_custom_call.1} parent=1 // pred_check_branch
      %39 = sbr.rel (0) target = $region17
    $region16: #{tpu_custom_call.1} parent=1 // pred_region
      %41 = vsyncadd [#allocation6], 0
      %s42 = sshll.u32 %s3, 4
      %s43 = int_to_ptr.hbm [resolvable:$true] %s42
      %s44 = sshll.u32 [#allocation7], 4
      %s45 = int_to_ptr.vmem [resolvable:$true] %s44
      %50 = dma.hbm_to_vmem [thread:$0]  %s43, 2048, %s45, [#allocation6], 128, 128, 8
    $region17: #{tpu_custom_call.1} parent=1 // pred_fallthru
      _
    // Predicated region
    $region18: #{tpu_custom_call.1} parent=1 // pred_check
      _
    $region19: #{tpu_custom_call.1} parent=1 // pred_check_branch
      %52 = sbr.rel (0) target = $region21
    $region20: #{tpu_custom_call.1} parent=1 // pred_region
      %54 = dma.done [#allocation3], 128
    $region21: #{tpu_custom_call.1} parent=1 // pred_fallthru
      _
    // Predicated region
    $region22: #{tpu_custom_call.1} parent=1 // pred_check
      _
    $region23: #{tpu_custom_call.1} parent=1 // pred_check_branch
      %56 = sbr.rel (0) target = $region25
    $region24: #{tpu_custom_call.1} parent=1 // pred_region
      %58 = dma.done [#allocation6], 16
    $region25: #{tpu_custom_call.1} parent=1 // pred_fallthru
      _
    // Predicated region
    $region26: #{tpu_custom_call.1} parent=1 // pred_check
      _
    $region27: #{tpu_custom_call.1} parent=1 // pred_check_branch
      %60 = sbr.rel (0) target = $region29
    $region28: #{tpu_custom_call.1} parent=1 // pred_region
      %62 = dma.done [#allocation6], 2048
    $region29: #{tpu_custom_call.1} parent=1 // pred_fallthru
      _
    %v63 = vld [vmem:[#allocation2] sm:$0xff]
    %v64 = vld [vmem:[#allocation7] sm:$0xff]
    %v65 = vld [vmem:[#allocation7 + $0x8] sm:$0xff]
    %v66 = vld [vmem:[#allocation7 + $0x10] sm:$0xff]
    %v67 = vld [vmem:[#allocation7 + $0x18] sm:$0xff]
    %v68 = vld [vmem:[#allocation7 + $0x20] sm:$0xff]
    %v69 = vld [vmem:[#allocation7 + $0x28] sm:$0xff]
    %v70 = vld [vmem:[#allocation7 + $0x30] sm:$0xff]
    %v71 = vld [vmem:[#allocation7 + $0x38] sm:$0xff]
    %v72 = vld [vmem:[#allocation7 + $0x40] sm:$0xff]
    %v73 = vld [vmem:[#allocation7 + $0x48] sm:$0xff]
    %v74 = vld [vmem:[#allocation7 + $0x50] sm:$0xff]
    %v75 = vld [vmem:[#allocation7 + $0x58] sm:$0xff]
    %v76 = vld [vmem:[#allocation7 + $0x60] sm:$0xff]
    %v77 = vld [vmem:[#allocation7 + $0x68] sm:$0xff]
    %v78 = vld [vmem:[#allocation7 + $0x70] sm:$0xff]
    %v79 = vld [vmem:[#allocation7 + $0x78] sm:$0xff]
    %v80 = vand.u32 %v79, 4294901760
    %81 = vmatpush.msra.mxu0 %v80
    %v82 = vand.u32 %v78, 4294901760
    %83 = vmatpush.msra.mxu0 %v82
    %v84 = vand.u32 %v77, 4294901760
    %85 = vmatpush.msra.mxu0 %v84
    %v86 = vand.u32 %v76, 4294901760
    %87 = vmatpush.msra.mxu0 %v86
    %v88 = vand.u32 %v75, 4294901760
    %89 = vmatpush.msra.mxu0 %v88
    %v90 = vand.u32 %v74, 4294901760
    %91 = vmatpush.msra.mxu0 %v90
    %v92 = vand.u32 %v73, 4294901760
    %93 = vmatpush.msra.mxu0 %v92
    %v94 = vand.u32 %v72, 4294901760
    %95 = vmatpush.msra.mxu0 %v94
    %v96 = vand.u32 %v71, 4294901760
    %97 = vmatpush.msra.mxu0 %v96
    %v98 = vand.u32 %v70, 4294901760
    %99 = vmatpush.msra.mxu0 %v98
    %v100 = vand.u32 %v69, 4294901760
    %101 = vmatpush.msra.mxu0 %v100
    %v102 = vand.u32 %v68, 4294901760
    %103 = vmatpush.msra.mxu0 %v102
    %v104 = vand.u32 %v67, 4294901760
    %105 = vmatpush.msra.mxu0 %v104
    %v106 = vand.u32 %v66, 4294901760
    %107 = vmatpush.msra.mxu0 %v106
    %v108 = vand.u32 %v65, 4294901760
    %109 = vmatpush.msra.mxu0 %v108
    %v110 = vand.u32 %v64, 4294901760
    %111 = vmatpush.msra.mxu0 %v110
    %v112 = vand.u32 %v63, 4294901760
    %v113 = vsub.f32 %v63, %v112
    %v114 = vand.u32 %v113, 4294901760
    %v115 = vsub.f32 %v113, %v114
    %v116 = vand.u32 %v115, 4294901760
    %117 = vmatmul.f32.gmra.mxu0 %v116
    %v118 = vpop.f32.mrf.mxu0
    %v119 = vadd.f32 0.0, %v118
    %120 = vdwg.mxu0
    %v121 = vand.u32 %v79, 4294901760
    %v122 = vsub.f32 %v79, %v121
    %v123 = vand.u32 %v122, 4294901760
    %v124 = vsub.f32 %v122, %v123
    %v125 = vand.u32 %v124, 4294901760
    %126 = vmatpush.msra.mxu0 %v125
    %v127 = vand.u32 %v78, 4294901760
    %v128 = vsub.f32 %v78, %v127
    %v129 = vand.u32 %v128, 4294901760
    %v130 = vsub.f32 %v128, %v129
    %v131 = vand.u32 %v130, 4294901760
    %132 = vmatpush.msra.mxu0 %v131
    %v133 = vand.u32 %v77, 4294901760
    %v134 = vsub.f32 %v77, %v133
    %v135 = vand.u32 %v134, 4294901760
    %v136 = vsub.f32 %v134, %v135
    %v137 = vand.u32 %v136, 4294901760
    %138 = vmatpush.msra.mxu0 %v137
    %v139 = vand.u32 %v76, 4294901760
    %v140 = vsub.f32 %v76, %v139
    %v141 = vand.u32 %v140, 4294901760
    %v142 = vsub.f32 %v140, %v141
    %v143 = vand.u32 %v142, 4294901760
    %144 = vmatpush.msra.mxu0 %v143
    %v145 = vand.u32 %v75, 4294901760
    %v146 = vsub.f32 %v75, %v145
    %v147 = vand.u32 %v146, 4294901760
    %v148 = vsub.f32 %v146, %v147
    %v149 = vand.u32 %v148, 4294901760
    %150 = vmatpush.msra.mxu0 %v149
    %v151 = vand.u32 %v74, 4294901760
    %v152 = vsub.f32 %v74, %v151
    %v153 = vand.u32 %v152, 4294901760
    %v154 = vsub.f32 %v152, %v153
    %v155 = vand.u32 %v154, 4294901760
    %156 = vmatpush.msra.mxu0 %v155
    %v157 = vand.u32 %v73, 4294901760
    %v158 = vsub.f32 %v73, %v157
    %v159 = vand.u32 %v158, 4294901760
    %v160 = vsub.f32 %v158, %v159
    %v161 = vand.u32 %v160, 4294901760
    %162 = vmatpush.msra.mxu0 %v161
    %v163 = vand.u32 %v72, 4294901760
    %v164 = vsub.f32 %v72, %v163
    %v165 = vand.u32 %v164, 4294901760
    %v166 = vsub.f32 %v164, %v165
    %v167 = vand.u32 %v166, 4294901760
    %168 = vmatpush.msra.mxu0 %v167
    %v169 = vand.u32 %v71, 4294901760
    %v170 = vsub.f32 %v71, %v169
    %v171 = vand.u32 %v170, 4294901760
    %v172 = vsub.f32 %v170, %v171
    %v173 = vand.u32 %v172, 4294901760
    %174 = vmatpush.msra.mxu0 %v173
    %v175 = vand.u32 %v70, 4294901760
    %v176 = vsub.f32 %v70, %v175
    %v177 = vand.u32 %v176, 4294901760
    %v178 = vsub.f32 %v176, %v177
    %v179 = vand.u32 %v178, 4294901760
    %180 = vmatpush.msra.mxu0 %v179
    %v181 = vand.u32 %v69, 4294901760
    %v182 = vsub.f32 %v69, %v181
    %v183 = vand.u32 %v182, 4294901760
    %v184 = vsub.f32 %v182, %v183
    %v185 = vand.u32 %v184, 4294901760
    %186 = vmatpush.msra.mxu0 %v185
    %v187 = vand.u32 %v68, 4294901760
    %v188 = vsub.f32 %v68, %v187
    %v189 = vand.u32 %v188, 4294901760
    %v190 = vsub.f32 %v188, %v189
    %v191 = vand.u32 %v190, 4294901760
    %192 = vmatpush.msra.mxu0 %v191
    %v193 = vand.u32 %v67, 4294901760
    %v194 = vsub.f32 %v67, %v193
    %v195 = vand.u32 %v194, 4294901760
    %v196 = vsub.f32 %v194, %v195
    %v197 = vand.u32 %v196, 4294901760
    %198 = vmatpush.msra.mxu0 %v197
    %v199 = vand.u32 %v66, 4294901760
    %v200 = vsub.f32 %v66, %v199
    %v201 = vand.u32 %v200, 4294901760
    %v202 = vsub.f32 %v200, %v201
    %v203 = vand.u32 %v202, 4294901760
    %204 = vmatpush.msra.mxu0 %v203
    %v205 = vand.u32 %v65, 4294901760
    %v206 = vsub.f32 %v65, %v205
    %v207 = vand.u32 %v206, 4294901760
    %v208 = vsub.f32 %v206, %v207
    %v209 = vand.u32 %v208, 4294901760
    %210 = vmatpush.msra.mxu0 %v209
    %v211 = vand.u32 %v64, 4294901760
    %v212 = vsub.f32 %v64, %v211
    %v213 = vand.u32 %v212, 4294901760
    %v214 = vsub.f32 %v212, %v213
    %v215 = vand.u32 %v214, 4294901760
    %216 = vmatpush.msra.mxu0 %v215
    %v217 = vand.u32 %v63, 4294901760
    %218 = vmatmul.f32.gmra.mxu0 %v217
    %v219 = vpop.f32.mrf.mxu0
    %v220 = vadd.f32 %v119, %v219
    %221 = vdwg.mxu0
    %v222 = vand.u32 %v79, 4294901760
    %v223 = vsub.f32 %v79, %v222
    %224 = vmatpush.msra.mxu0 %v223
    %v225 = vand.u32 %v78, 4294901760
    %v226 = vsub.f32 %v78, %v225
    %227 = vmatpush.msra.mxu0 %v226
    %v228 = vand.u32 %v77, 4294901760
    %v229 = vsub.f32 %v77, %v228
    %230 = vmatpush.msra.mxu0 %v229
    %v231 = vand.u32 %v76, 4294901760
    %v232 = vsub.f32 %v76, %v231
    %233 = vmatpush.msra.mxu0 %v232
    %v234 = vand.u32 %v75, 4294901760
    %v235 = vsub.f32 %v75, %v234
    %236 = vmatpush.msra.mxu0 %v235
    %v237 = vand.u32 %v74, 4294901760
    %v238 = vsub.f32 %v74, %v237
    %239 = vmatpush.msra.mxu0 %v238
    %v240 = vand.u32 %v73, 4294901760
    %v241 = vsub.f32 %v73, %v240
    %242 = vmatpush.msra.mxu0 %v241
    %v243 = vand.u32 %v72, 4294901760
    %v244 = vsub.f32 %v72, %v243
    %245 = vmatpush.msra.mxu0 %v244
    %v246 = vand.u32 %v71, 4294901760
    %v247 = vsub.f32 %v71, %v246
    %248 = vmatpush.msra.mxu0 %v247
    %v249 = vand.u32 %v70, 4294901760
    %v250 = vsub.f32 %v70, %v249
    %251 = vmatpush.msra.mxu0 %v250
    %v252 = vand.u32 %v69, 4294901760
    %v253 = vsub.f32 %v69, %v252
    %254 = vmatpush.msra.mxu0 %v253
    %v255 = vand.u32 %v68, 4294901760
    %v256 = vsub.f32 %v68, %v255
    %257 = vmatpush.msra.mxu0 %v256
    %v258 = vand.u32 %v67, 4294901760
    %v259 = vsub.f32 %v67, %v258
    %260 = vmatpush.msra.mxu0 %v259
    %v261 = vand.u32 %v66, 4294901760
    %v262 = vsub.f32 %v66, %v261
    %263 = vmatpush.msra.mxu0 %v262
    %v264 = vand.u32 %v65, 4294901760
    %v265 = vsub.f32 %v65, %v264
    %266 = vmatpush.msra.mxu0 %v265
    %v267 = vand.u32 %v64, 4294901760
    %v268 = vsub.f32 %v64, %v267
    %269 = vmatpush.msra.mxu0 %v268
    %v270 = vand.u32 %v63, 4294901760
    %v271 = vsub.f32 %v63, %v270
    %272 = vmatmul.f32.gmra.mxu0 %v271
    %v273 = vpop.f32.mrf.mxu0
    %v274 = vadd.f32 %v220, %v273
    %275 = vdwg.mxu0
    %v276 = vand.u32 %v79, 4294901760
    %277 = vmatpush.msra.mxu0 %v276
    %v278 = vand.u32 %v78, 4294901760
    %279 = vmatpush.msra.mxu0 %v278
    %v280 = vand.u32 %v77, 4294901760
    %281 = vmatpush.msra.mxu0 %v280
    %v282 = vand.u32 %v76, 4294901760
    %283 = vmatpush.msra.mxu0 %v282
    %v284 = vand.u32 %v75, 4294901760
    %285 = vmatpush.msra.mxu0 %v284
    %v286 = vand.u32 %v74, 4294901760
    %287 = vmatpush.msra.mxu0 %v286
    %v288 = vand.u32 %v73, 4294901760
    %289 = vmatpush.msra.mxu0 %v288
    %v290 = vand.u32 %v72, 4294901760
    %291 = vmatpush.msra.mxu0 %v290
    %v292 = vand.u32 %v71, 4294901760
    %293 = vmatpush.msra.mxu0 %v292
    %v294 = vand.u32 %v70, 4294901760
    %295 = vmatpush.msra.mxu0 %v294
    %v296 = vand.u32 %v69, 4294901760
    %297 = vmatpush.msra.mxu0 %v296
    %v298 = vand.u32 %v68, 4294901760
    %299 = vmatpush.msra.mxu0 %v298
    %v300 = vand.u32 %v67, 4294901760
    %301 = vmatpush.msra.mxu0 %v300
    %v302 = vand.u32 %v66, 4294901760
    %303 = vmatpush.msra.mxu0 %v302
    %v304 = vand.u32 %v65, 4294901760
    %305 = vmatpush.msra.mxu0 %v304
    %v306 = vand.u32 %v64, 4294901760
    %307 = vmatpush.msra.mxu0 %v306
    %v308 = vand.u32 %v63, 4294901760
    %v309 = vsub.f32 %v63, %v308
    %v310 = vand.u32 %v309, 4294901760
    %311 = vmatmul.f32.gmra.mxu0 %v310
    %v312 = vpop.f32.mrf.mxu0
    %v313 = vadd.f32 %v274, %v312
    %314 = vdwg.mxu0
    %v315 = vand.u32 %v79, 4294901760
    %v316 = vsub.f32 %v79, %v315
    %v317 = vand.u32 %v316, 4294901760
    %318 = vmatpush.msra.mxu0 %v317
    %v319 = vand.u32 %v78, 4294901760
    %v320 = vsub.f32 %v78, %v319
    %v321 = vand.u32 %v320, 4294901760
    %322 = vmatpush.msra.mxu0 %v321
    %v323 = vand.u32 %v77, 4294901760
    %v324 = vsub.f32 %v77, %v323
    %v325 = vand.u32 %v324, 4294901760
    %326 = vmatpush.msra.mxu0 %v325
    %v327 = vand.u32 %v76, 4294901760
    %v328 = vsub.f32 %v76, %v327
    %v329 = vand.u32 %v328, 4294901760
    %330 = vmatpush.msra.mxu0 %v329
    %v331 = vand.u32 %v75, 4294901760
    %v332 = vsub.f32 %v75, %v331
    %v333 = vand.u32 %v332, 4294901760
    %334 = vmatpush.msra.mxu0 %v333
    %v335 = vand.u32 %v74, 4294901760
    %v336 = vsub.f32 %v74, %v335
    %v337 = vand.u32 %v336, 4294901760
    %338 = vmatpush.msra.mxu0 %v337
    %v339 = vand.u32 %v73, 4294901760
    %v340 = vsub.f32 %v73, %v339
    %v341 = vand.u32 %v340, 4294901760
    %342 = vmatpush.msra.mxu0 %v341
    %v343 = vand.u32 %v72, 4294901760
    %v344 = vsub.f32 %v72, %v343
    %v345 = vand.u32 %v344, 4294901760
    %346 = vmatpush.msra.mxu0 %v345
    %v347 = vand.u32 %v71, 4294901760
    %v348 = vsub.f32 %v71, %v347
    %v349 = vand.u32 %v348, 4294901760
    %350 = vmatpush.msra.mxu0 %v349
    %v351 = vand.u32 %v70, 4294901760
    %v352 = vsub.f32 %v70, %v351
    %v353 = vand.u32 %v352, 4294901760
    %354 = vmatpush.msra.mxu0 %v353
    %v355 = vand.u32 %v69, 4294901760
    %v356 = vsub.f32 %v69, %v355
    %v357 = vand.u32 %v356, 4294901760
    %358 = vmatpush.msra.mxu0 %v357
    %v359 = vand.u32 %v68, 4294901760
    %v360 = vsub.f32 %v68, %v359
    %v361 = vand.u32 %v360, 4294901760
    %362 = vmatpush.msra.mxu0 %v361
    %v363 = vand.u32 %v67, 4294901760
    %v364 = vsub.f32 %v67, %v363
    %v365 = vand.u32 %v364, 4294901760
    %366 = vmatpush.msra.mxu0 %v365
    %v367 = vand.u32 %v66, 4294901760
    %v368 = vsub.f32 %v66, %v367
    %v369 = vand.u32 %v368, 4294901760
    %370 = vmatpush.msra.mxu0 %v369
    %v371 = vand.u32 %v65, 4294901760
    %v372 = vsub.f32 %v65, %v371
    %v373 = vand.u32 %v372, 4294901760
    %374 = vmatpush.msra.mxu0 %v373
    %v375 = vand.u32 %v64, 4294901760
    %v376 = vsub.f32 %v64, %v375
    %v377 = vand.u32 %v376, 4294901760
    %378 = vmatpush.msra.mxu0 %v377
    %v379 = vand.u32 %v63, 4294901760
    %380 = vmatmul.f32.gmra.mxu0 %v379
    %v381 = vpop.f32.mrf.mxu0
    %v382 = vadd.f32 %v313, %v381
    %383 = vdwg.mxu0
    %v384 = vand.u32 %v79, 4294901760
    %385 = vmatpush.msra.mxu0 %v384
    %v386 = vand.u32 %v78, 4294901760
    %387 = vmatpush.msra.mxu0 %v386
    %v388 = vand.u32 %v77, 4294901760
    %389 = vmatpush.msra.mxu0 %v388
    %v390 = vand.u32 %v76, 4294901760
    %391 = vmatpush.msra.mxu0 %v390
    %v392 = vand.u32 %v75, 4294901760
    %393 = vmatpush.msra.mxu0 %v392
    %v394 = vand.u32 %v74, 4294901760
    %395 = vmatpush.msra.mxu0 %v394
    %v396 = vand.u32 %v73, 4294901760
    %397 = vmatpush.msra.mxu0 %v396
    %v398 = vand.u32 %v72, 4294901760
    %399 = vmatpush.msra.mxu0 %v398
    %v400 = vand.u32 %v71, 4294901760
    %401 = vmatpush.msra.mxu0 %v400
    %v402 = vand.u32 %v70, 4294901760
    %403 = vmatpush.msra.mxu0 %v402
    %v404 = vand.u32 %v69, 4294901760
    %405 = vmatpush.msra.mxu0 %v404
    %v406 = vand.u32 %v68, 4294901760
    %407 = vmatpush.msra.mxu0 %v406
    %v408 = vand.u32 %v67, 4294901760
    %409 = vmatpush.msra.mxu0 %v408
    %v410 = vand.u32 %v66, 4294901760
    %411 = vmatpush.msra.mxu0 %v410
    %v412 = vand.u32 %v65, 4294901760
    %413 = vmatpush.msra.mxu0 %v412
    %v414 = vand.u32 %v64, 4294901760
    %415 = vmatpush.msra.mxu0 %v414
    %v416 = vand.u32 %v63, 4294901760
    %417 = vmatmul.f32.gmra.mxu0 %v416
    %v418 = vpop.f32.mrf.mxu0
    %v419 = vadd.f32 %v382, %v418
    %420 = vdwg.mxu0
    %v421 = vsub.f32 %v63, %v419
    %v422 = vmul.f32 %v421, %v421
    %v423 = vand.u32 %v79, 4294901760
    %424 = vmatpush.msra.mxu0 %v423
    %v425 = vand.u32 %v78, 4294901760
    %426 = vmatpush.msra.mxu0 %v425
    %v427 = vand.u32 %v77, 4294901760
    %428 = vmatpush.msra.mxu0 %v427
    %v429 = vand.u32 %v76, 4294901760
    %430 = vmatpush.msra.mxu0 %v429
    %v431 = vand.u32 %v75, 4294901760
    %432 = vmatpush.msra.mxu0 %v431
    %v433 = vand.u32 %v74, 4294901760
    %434 = vmatpush.msra.mxu0 %v433
    %v435 = vand.u32 %v73, 4294901760
    %436 = vmatpush.msra.mxu0 %v435
    %v437 = vand.u32 %v72, 4294901760
    %438 = vmatpush.msra.mxu0 %v437
    %v439 = vand.u32 %v71, 4294901760
    %440 = vmatpush.msra.mxu0 %v439
    %v441 = vand.u32 %v70, 4294901760
    %442 = vmatpush.msra.mxu0 %v441
    %v443 = vand.u32 %v69, 4294901760
    %444 = vmatpush.msra.mxu0 %v443
    %v445 = vand.u32 %v68, 4294901760
    %446 = vmatpush.msra.mxu0 %v445
    %v447 = vand.u32 %v67, 4294901760
    %448 = vmatpush.msra.mxu0 %v447
    %v449 = vand.u32 %v66, 4294901760
    %450 = vmatpush.msra.mxu0 %v449
    %v451 = vand.u32 %v65, 4294901760
    %452 = vmatpush.msra.mxu0 %v451
    %v453 = vand.u32 %v64, 4294901760
    %454 = vmatpush.msra.mxu0 %v453
    %v455 = vand.u32 %v422, 4294901760
    %v456 = vsub.f32 %v422, %v455
    %v457 = vand.u32 %v456, 4294901760
    %v458 = vsub.f32 %v456, %v457
    %v459 = vand.u32 %v458, 4294901760
    %460 = vmatmul.f32.gmra.mxu0 %v459
    %v461 = vpop.f32.mrf.mxu0
    %v462 = vadd.f32 0.0, %v461
    %463 = vdwg.mxu0
    %v464 = vand.u32 %v79, 4294901760
    %v465 = vsub.f32 %v79, %v464
    %v466 = vand.u32 %v465, 4294901760
    %v467 = vsub.f32 %v465, %v466
    %v468 = vand.u32 %v467, 4294901760
    %469 = vmatpush.msra.mxu0 %v468
    %v470 = vand.u32 %v78, 4294901760
    %v471 = vsub.f32 %v78, %v470
    %v472 = vand.u32 %v471, 4294901760
    %v473 = vsub.f32 %v471, %v472
    %v474 = vand.u32 %v473, 4294901760
    %475 = vmatpush.msra.mxu0 %v474
    %v476 = vand.u32 %v77, 4294901760
    %v477 = vsub.f32 %v77, %v476
    %v478 = vand.u32 %v477, 4294901760
    %v479 = vsub.f32 %v477, %v478
    %v480 = vand.u32 %v479, 4294901760
    %481 = vmatpush.msra.mxu0 %v480
    %v482 = vand.u32 %v76, 4294901760
    %v483 = vsub.f32 %v76, %v482
    %v484 = vand.u32 %v483, 4294901760
    %v485 = vsub.f32 %v483, %v484
    %v486 = vand.u32 %v485, 4294901760
    %487 = vmatpush.msra.mxu0 %v486
    %v488 = vand.u32 %v75, 4294901760
    %v489 = vsub.f32 %v75, %v488
    %v490 = vand.u32 %v489, 4294901760
    %v491 = vsub.f32 %v489, %v490
    %v492 = vand.u32 %v491, 4294901760
    %493 = vmatpush.msra.mxu0 %v492
    %v494 = vand.u32 %v74, 4294901760
    %v495 = vsub.f32 %v74, %v494
    %v496 = vand.u32 %v495, 4294901760
    %v497 = vsub.f32 %v495, %v496
    %v498 = vand.u32 %v497, 4294901760
    %499 = vmatpush.msra.mxu0 %v498
    %v500 = vand.u32 %v73, 4294901760
    %v501 = vsub.f32 %v73, %v500
    %v502 = vand.u32 %v501, 4294901760
    %v503 = vsub.f32 %v501, %v502
    %v504 = vand.u32 %v503, 4294901760
    %505 = vmatpush.msra.mxu0 %v504
    %v506 = vand.u32 %v72, 4294901760
    %v507 = vsub.f32 %v72, %v506
    %v508 = vand.u32 %v507, 4294901760
    %v509 = vsub.f32 %v507, %v508
    %v510 = vand.u32 %v509, 4294901760
    %511 = vmatpush.msra.mxu0 %v510
    %v512 = vand.u32 %v71, 4294901760
    %v513 = vsub.f32 %v71, %v512
    %v514 = vand.u32 %v513, 4294901760
    %v515 = vsub.f32 %v513, %v514
    %v516 = vand.u32 %v515, 4294901760
    %517 = vmatpush.msra.mxu0 %v516
    %v518 = vand.u32 %v70, 4294901760
    %v519 = vsub.f32 %v70, %v518
    %v520 = vand.u32 %v519, 4294901760
    %v521 = vsub.f32 %v519, %v520
    %v522 = vand.u32 %v521, 4294901760
    %523 = vmatpush.msra.mxu0 %v522
    %v524 = vand.u32 %v69, 4294901760
    %v525 = vsub.f32 %v69, %v524
    %v526 = vand.u32 %v525, 4294901760
    %v527 = vsub.f32 %v525, %v526
    %v528 = vand.u32 %v527, 4294901760
    %529 = vmatpush.msra.mxu0 %v528
    %v530 = vand.u32 %v68, 4294901760
    %v531 = vsub.f32 %v68, %v530
    %v532 = vand.u32 %v531, 4294901760
    %v533 = vsub.f32 %v531, %v532
    %v534 = vand.u32 %v533, 4294901760
    %535 = vmatpush.msra.mxu0 %v534
    %v536 = vand.u32 %v67, 4294901760
    %v537 = vsub.f32 %v67, %v536
    %v538 = vand.u32 %v537, 4294901760
    %v539 = vsub.f32 %v537, %v538
    %v540 = vand.u32 %v539, 4294901760
    %541 = vmatpush.msra.mxu0 %v540
    %v542 = vand.u32 %v66, 4294901760
    %v543 = vsub.f32 %v66, %v542
    %v544 = vand.u32 %v543, 4294901760
    %v545 = vsub.f32 %v543, %v544
    %v546 = vand.u32 %v545, 4294901760
    %547 = vmatpush.msra.mxu0 %v546
    %v548 = vand.u32 %v65, 4294901760
    %v549 = vsub.f32 %v65, %v548
    %v550 = vand.u32 %v549, 4294901760
    %v551 = vsub.f32 %v549, %v550
    %v552 = vand.u32 %v551, 4294901760
    %553 = vmatpush.msra.mxu0 %v552
    %v554 = vand.u32 %v64, 4294901760
    %v555 = vsub.f32 %v64, %v554
    %v556 = vand.u32 %v555, 4294901760
    %v557 = vsub.f32 %v555, %v556
    %v558 = vand.u32 %v557, 4294901760
    %559 = vmatpush.msra.mxu0 %v558
    %v560 = vand.u32 %v422, 4294901760
    %561 = vmatmul.f32.gmra.mxu0 %v560
    %v562 = vpop.f32.mrf.mxu0
    %v563 = vadd.f32 %v462, %v562
    %564 = vdwg.mxu0
    %v565 = vand.u32 %v79, 4294901760
    %v566 = vsub.f32 %v79, %v565
    %567 = vmatpush.msra.mxu0 %v566
    %v568 = vand.u32 %v78, 4294901760
    %v569 = vsub.f32 %v78, %v568
    %570 = vmatpush.msra.mxu0 %v569
    %v571 = vand.u32 %v77, 4294901760
    %v572 = vsub.f32 %v77, %v571
    %573 = vmatpush.msra.mxu0 %v572
    %v574 = vand.u32 %v76, 4294901760
    %v575 = vsub.f32 %v76, %v574
    %576 = vmatpush.msra.mxu0 %v575
    %v577 = vand.u32 %v75, 4294901760
    %v578 = vsub.f32 %v75, %v577
    %579 = vmatpush.msra.mxu0 %v578
    %v580 = vand.u32 %v74, 4294901760
    %v581 = vsub.f32 %v74, %v580
    %582 = vmatpush.msra.mxu0 %v581
    %v583 = vand.u32 %v73, 4294901760
    %v584 = vsub.f32 %v73, %v583
    %585 = vmatpush.msra.mxu0 %v584
    %v586 = vand.u32 %v72, 4294901760
    %v587 = vsub.f32 %v72, %v586
    %588 = vmatpush.msra.mxu0 %v587
    %v589 = vand.u32 %v71, 4294901760
    %v590 = vsub.f32 %v71, %v589
    %591 = vmatpush.msra.mxu0 %v590
    %v592 = vand.u32 %v70, 4294901760
    %v593 = vsub.f32 %v70, %v592
    %594 = vmatpush.msra.mxu0 %v593
    %v595 = vand.u32 %v69, 4294901760
    %v596 = vsub.f32 %v69, %v595
    %597 = vmatpush.msra.mxu0 %v596
    %v598 = vand.u32 %v68, 4294901760
    %v599 = vsub.f32 %v68, %v598
    %600 = vmatpush.msra.mxu0 %v599
    %v601 = vand.u32 %v67, 4294901760
    %v602 = vsub.f32 %v67, %v601
    %603 = vmatpush.msra.mxu0 %v602
    %v604 = vand.u32 %v66, 4294901760
    %v605 = vsub.f32 %v66, %v604
    %606 = vmatpush.msra.mxu0 %v605
    %v607 = vand.u32 %v65, 4294901760
    %v608 = vsub.f32 %v65, %v607
    %609 = vmatpush.msra.mxu0 %v608
    %v610 = vand.u32 %v64, 4294901760
    %v611 = vsub.f32 %v64, %v610
    %612 = vmatpush.msra.mxu0 %v611
    %v613 = vand.u32 %v422, 4294901760
    %v614 = vsub.f32 %v422, %v613
    %615 = vmatmul.f32.gmra.mxu0 %v614
    %v616 = vpop.f32.mrf.mxu0
    %v617 = vadd.f32 %v563, %v616
    %618 = vdwg.mxu0
    %v619 = vand.u32 %v79, 4294901760
    %620 = vmatpush.msra.mxu0 %v619
    %v621 = vand.u32 %v78, 4294901760
    %622 = vmatpush.msra.mxu0 %v621
    %v623 = vand.u32 %v77, 4294901760
    %624 = vmatpush.msra.mxu0 %v623
    %v625 = vand.u32 %v76, 4294901760
    %626 = vmatpush.msra.mxu0 %v625
    %v627 = vand.u32 %v75, 4294901760
    %628 = vmatpush.msra.mxu0 %v627
    %v629 = vand.u32 %v74, 4294901760
    %630 = vmatpush.msra.mxu0 %v629
    %v631 = vand.u32 %v73, 4294901760
    %632 = vmatpush.msra.mxu0 %v631
    %v633 = vand.u32 %v72, 4294901760
    %634 = vmatpush.msra.mxu0 %v633
    %v635 = vand.u32 %v71, 4294901760
    %636 = vmatpush.msra.mxu0 %v635
    %v637 = vand.u32 %v70, 4294901760
    %638 = vmatpush.msra.mxu0 %v637
    %v639 = vand.u32 %v69, 4294901760
    %640 = vmatpush.msra.mxu0 %v639
    %v641 = vand.u32 %v68, 4294901760
    %642 = vmatpush.msra.mxu0 %v641
    %v643 = vand.u32 %v67, 4294901760
    %644 = vmatpush.msra.mxu0 %v643
    %v645 = vand.u32 %v66, 4294901760
    %646 = vmatpush.msra.mxu0 %v645
    %v647 = vand.u32 %v65, 4294901760
    %648 = vmatpush.msra.mxu0 %v647
    %v649 = vand.u32 %v64, 4294901760
    %650 = vmatpush.msra.mxu0 %v649
    %v651 = vand.u32 %v422, 4294901760
    %v652 = vsub.f32 %v422, %v651
    %v653 = vand.u32 %v652, 4294901760
    %654 = vmatmul.f32.gmra.mxu0 %v653
    %v655 = vpop.f32.mrf.mxu0
    %v656 = vadd.f32 %v617, %v655
    %657 = vdwg.mxu0
    %v658 = vand.u32 %v79, 4294901760
    %v659 = vsub.f32 %v79, %v658
    %v660 = vand.u32 %v659, 4294901760
    %661 = vmatpush.msra.mxu0 %v660
    %v662 = vand.u32 %v78, 4294901760
    %v663 = vsub.f32 %v78, %v662
    %v664 = vand.u32 %v663, 4294901760
    %665 = vmatpush.msra.mxu0 %v664
    %v666 = vand.u32 %v77, 4294901760
    %v667 = vsub.f32 %v77, %v666
    %v668 = vand.u32 %v667, 4294901760
    %669 = vmatpush.msra.mxu0 %v668
    %v670 = vand.u32 %v76, 4294901760
    %v671 = vsub.f32 %v76, %v670
    %v672 = vand.u32 %v671, 4294901760
    %673 = vmatpush.msra.mxu0 %v672
    %v674 = vand.u32 %v75, 4294901760
    %v675 = vsub.f32 %v75, %v674
    %v676 = vand.u32 %v675, 4294901760
    %677 = vmatpush.msra.mxu0 %v676
    %v678 = vand.u32 %v74, 4294901760
    %v679 = vsub.f32 %v74, %v678
    %v680 = vand.u32 %v679, 4294901760
    %681 = vmatpush.msra.mxu0 %v680
    %v682 = vand.u32 %v73, 4294901760
    %v683 = vsub.f32 %v73, %v682
    %v684 = vand.u32 %v683, 4294901760
    %685 = vmatpush.msra.mxu0 %v684
    %v686 = vand.u32 %v72, 4294901760
    %v687 = vsub.f32 %v72, %v686
    %v688 = vand.u32 %v687, 4294901760
    %689 = vmatpush.msra.mxu0 %v688
    %v690 = vand.u32 %v71, 4294901760
    %v691 = vsub.f32 %v71, %v690
    %v692 = vand.u32 %v691, 4294901760
    %693 = vmatpush.msra.mxu0 %v692
    %v694 = vand.u32 %v70, 4294901760
    %v695 = vsub.f32 %v70, %v694
    %v696 = vand.u32 %v695, 4294901760
    %697 = vmatpush.msra.mxu0 %v696
    %v698 = vand.u32 %v69, 4294901760
    %v699 = vsub.f32 %v69, %v698
    %v700 = vand.u32 %v699, 4294901760
    %701 = vmatpush.msra.mxu0 %v700
    %v702 = vand.u32 %v68, 4294901760
    %v703 = vsub.f32 %v68, %v702
    %v704 = vand.u32 %v703, 4294901760
    %705 = vmatpush.msra.mxu0 %v704
    %v706 = vand.u32 %v67, 4294901760
    %v707 = vsub.f32 %v67, %v706
    %v708 = vand.u32 %v707, 4294901760
    %709 = vmatpush.msra.mxu0 %v708
    %v710 = vand.u32 %v66, 4294901760
    %v711 = vsub.f32 %v66, %v710
    %v712 = vand.u32 %v711, 4294901760
    %713 = vmatpush.msra.mxu0 %v712
    %v714 = vand.u32 %v65, 4294901760
    %v715 = vsub.f32 %v65, %v714
    %v716 = vand.u32 %v715, 4294901760
    %717 = vmatpush.msra.mxu0 %v716
    %v718 = vand.u32 %v64, 4294901760
    %v719 = vsub.f32 %v64, %v718
    %v720 = vand.u32 %v719, 4294901760
    %721 = vmatpush.msra.mxu0 %v720
    %v722 = vand.u32 %v422, 4294901760
    %723 = vmatmul.f32.gmra.mxu0 %v722
    %v724 = vpop.f32.mrf.mxu0
    %v725 = vadd.f32 %v656, %v724
    %726 = vdwg.mxu0
    %v727 = vand.u32 %v79, 4294901760
    %728 = vmatpush.msra.mxu0 %v727
    %v729 = vand.u32 %v78, 4294901760
    %730 = vmatpush.msra.mxu0 %v729
    %v731 = vand.u32 %v77, 4294901760
    %732 = vmatpush.msra.mxu0 %v731
    %v733 = vand.u32 %v76, 4294901760
    %734 = vmatpush.msra.mxu0 %v733
    %v735 = vand.u32 %v75, 4294901760
    %736 = vmatpush.msra.mxu0 %v735
    %v737 = vand.u32 %v74, 4294901760
    %738 = vmatpush.msra.mxu0 %v737
    %v739 = vand.u32 %v73, 4294901760
    %740 = vmatpush.msra.mxu0 %v739
    %v741 = vand.u32 %v72, 4294901760
    %742 = vmatpush.msra.mxu0 %v741
    %v743 = vand.u32 %v71, 4294901760
    %744 = vmatpush.msra.mxu0 %v743
    %v745 = vand.u32 %v70, 4294901760
    %746 = vmatpush.msra.mxu0 %v745
    %v747 = vand.u32 %v69, 4294901760
    %748 = vmatpush.msra.mxu0 %v747
    %v749 = vand.u32 %v68, 4294901760
    %750 = vmatpush.msra.mxu0 %v749
    %v751 = vand.u32 %v67, 4294901760
    %752 = vmatpush.msra.mxu0 %v751
    %v753 = vand.u32 %v66, 4294901760
    %754 = vmatpush.msra.mxu0 %v753
    %v755 = vand.u32 %v65, 4294901760
    %756 = vmatpush.msra.mxu0 %v755
    %v757 = vand.u32 %v64, 4294901760
    %758 = vmatpush.msra.mxu0 %v757
    %v759 = vand.u32 %v422, 4294901760
    %760 = vmatmul.f32.gmra.mxu0 %v759
    %v761 = vpop.f32.mrf.mxu0
    %v762 = vadd.f32 %v725, %v761
    %763 = vdwg.mxu0
    %v764 = vmul.f32 %v762, 32.0
    %v765 = vrcp.pop 31.0
    %v766 = vmul.f32 31.0, %v765
    %v767 = vsub.f32 1.0, %v766
    %v768 = vmul.f32 %v765, %v767
    %v769 = vadd.f32 %v765, %v768
    %vm770 = vweird.f32 %v765
    %v771 = vsel %vm770, %v765, %v769
    %v772 = vmul.f32 %v764, %v771
    %v773 = vadd.f32 %v772, 1e-06
    %v774 = vrsqrt.pop %v773
    %v775 = vmul.f32 %v774, %v773
    %v776 = vmul.f32 %v775, %v774
    %v777 = vmul.f32 0.5, %v776
    %v778 = vsub.f32 1.5, %v777
    %v779 = vmul.f32 %v774, %v778
    %vm780 = vweird.f32 %v773
    %vm781 = vweird.f32 %v774
    %vm782 = vmor %vm780, %vm781
    %v783 = vsel %vm782, %v774, %v779
    %v784 = vld [vmem:[#allocation5] sm:$0x1]
    %v785 = vmul.f32 %v421, %v783
    %v787 = vperm.slane %v784, 0
    %v789 = vmul.f32 %v787, %v785
    %v790 = vld [vmem:[%s2] sm:$0x1]
    %v792 = vperm.slane %v790, 0
    %v794 = vadd.f32 %v789, %v792
    %795 = vst [vmem:[#allocation8] sm:$0xff] %v794
    // Predicated region
    $region30: #{tpu_custom_call.1} parent=1 // pred_check
      _
    $region31: #{tpu_custom_call.1} parent=1 // pred_check_branch
      %797 = sbr.rel (0) target = $region33
    $region32: #{tpu_custom_call.1} parent=1 // pred_region
      %799 = vsyncadd [#allocation4], 64
      %s800 = sshll.u32 [#allocation8], 4
      %s801 = int_to_ptr.vmem [resolvable:$true] %s800
      %s802 = sshll.u32 %s4, 4
      %s803 = int_to_ptr.hbm [resolvable:$true] %s802
      %808 = dma.vmem_to_hbm [thread:$0]  %s801, 64, %s803, [#allocation4], 64, 64, 4
    $region33: #{tpu_custom_call.1} parent=1 // pred_fallthru
      _
    // Predicated region
    $region34: #{tpu_custom_call.1} parent=1 // pred_check
      _
    $region35: #{tpu_custom_call.1} parent=1 // pred_check_branch
      %810 = sbr.rel (0) target = $region37
    $region36: #{tpu_custom_call.1} parent=1 // pred_region
      %812 = dma.done [#allocation4], 128
    $region37: #{tpu_custom_call.1} parent=1 // pred_fallthru
      _
    %813 = vsyncpa [#allocation3], 1
    %814 = vsyncpa [#allocation6], 1
    %815 = vsyncpa [#allocation4], 1

</llo_original>
